<compile_context>
chip_gen: v7x
topology: tpu7x:2x2x1
jax: 0.10.0
libtpu: 0.0.40
codegen_flags: <defaults>
</compile_context>

<pallas_src>
import functools

import jax
import jax.numpy as jnp
from jax import lax
from jax.experimental import pallas as pl
from jax.experimental.pallas import tpu as pltpu


# ------------------------------ helpers --------------------------------------

def _round_up(v, m):
    return ((v + m - 1) // m) * m


def _vmem_capacity_bytes():
    try:
        info = pltpu.get_tpu_info()
        cap = int(getattr(info, "vmem_capacity_bytes", 0) or 0)
        if cap > 0:
            return cap
    except Exception:
        pass
    return 64 * 1024 * 1024   # v7x per-core capacity: most conservative default


def _block_spec(block_shape, index_map, n_buffers=None):
    """BlockSpec with optional deeper pipelining, falling back gracefully."""
    if n_buffers is not None and n_buffers != 2:
        try:
            return pl.BlockSpec(block_shape, index_map,
                                pipeline_mode=pl.Buffered(n_buffers))
        except Exception:
            pass
    return pl.BlockSpec(block_shape, index_map)


def _softmax_rows(att, approx):
    # PyTorch computes softmax(rowmax(att) - att).  Folding the usual softmax
    # stabilization into it:  (rowmax - att) - rowmax_j(rowmax - att)
    #                       =  rowmin(att) - att   (always <= 0, stable).
    # So the min-based exponent below is the *fused stabilization*, not a sign
    # flip.
    e = jnp.exp(jnp.min(att, axis=-1, keepdims=True) - att)
    denom = jnp.sum(e, axis=-1, keepdims=True)
    return e * pl.reciprocal(denom, approx=approx)


# --------------- single-pass kernel: whole (C, HW) slab resident -------------

def _single_pass_kernel(beta_ref, x_ref, o_ref, *scratch, approx, mm_dtype):
    C, hw = x_ref.shape
    c_band = o_ref.shape[0]
    xpad_ref = scratch[0] if scratch else None     # only present when HW%128 != 0

    x = x_ref[...]                                 # (C, HW), native dtype
    if xpad_ref is not None:
        # Ragged HW: stage x into a lane-aligned, zero-padded VMEM copy so the
        # Gram contraction never touches undefined physical padding lanes.
        xpad_ref[...] = jnp.zeros_like(xpad_ref)
        xpad_ref[:, :hw] = x
        xm = xpad_ref[...]                         # (C, hw128), zero tail
    else:
        xm = x

    if c_band == C:
        xq, xqm = x, xm
    else:
        # C-band split (v7x 2-TC utilisation when B == 1).
        row0 = pl.multiple_of(pl.program_id(1) * c_band, 8)
        xq = x_ref[pl.ds(row0, c_band), :]
        xqm = xpad_ref[pl.ds(row0, c_band), :] if xpad_ref is not None else xq

    lhs_mm = xqm.astype(mm_dtype)
    rhs_mm = xm.astype(mm_dtype)
    # Gram matrix: contract the lane (HW) axis of both operands on the MXU
    # (no materialized transpose), accumulate in f32.
    att = lax.dot_general(lhs_mm, rhs_mm,
                          dimension_numbers=(((1,), (1,)), ((), ())),
                          preferred_element_type=jnp.float32)   # (c_band, C)
    p = _softmax_rows(att, approx)
    feat = jnp.dot(p.astype(mm_dtype), rhs_mm,
                   preferred_element_type=jnp.float32)          # (c_band, hw*)
    if xpad_ref is not None:
        feat = feat[:, :hw]
    # Lean epilogue: scale in f32, cast once, add the residual in native dtype.
    o_ref[...] = (beta_ref[0] * feat).astype(o_ref.dtype) + xq


# --------------- two-phase kernel: HW chunked, bounded VMEM -------------------

def _two_phase_kernel(beta_ref, x_ref, o_ref, att_ref, p_ref, *scratch,
                      hw_valid, approx, mm_dtype):
    xcache_ref = scratch[0] if scratch else None
    C, hw_tile = x_ref.shape
    ragged = (hw_valid % hw_tile) != 0             # static

    ph = pl.program_id(1)          # 0: accumulate att, 1: emit output chunks
    k = pl.program_id(2)           # HW chunk index
    n_k = pl.num_programs(2)

    @pl.when((ph == 0) & (k == 0))
    def _init():
        att_ref[...] = jnp.zeros_like(att_ref)

    @pl.when(ph == 0)
    def _accumulate():
        x = x_ref[...]                             # (C, hw_tile)
        if ragged:
            # The edge chunk reads past the end of HW: zero the overhang so it
            # contributes nothing to the Gram contraction (and to the cache).
            col = lax.broadcasted_iota(jnp.int32, x.shape, 1) + k * hw_tile
            x = jnp.where(col < hw_valid, x, jnp.zeros_like(x))
        xm = x.astype(mm_dtype)
        att_ref[...] += lax.dot_general(
            xm, xm, dimension_numbers=(((1,), (1,)), ((), ())),
            preferred_element_type=jnp.float32)
        if xcache_ref is not None:
            off = pl.multiple_of(k * hw_tile, hw_tile)
            xcache_ref[:, pl.ds(off, hw_tile)] = x

    # Softmax at the *tail of phase 0* so it overlaps the pipeline's prefetch
    # of phase 1's first chunk instead of serializing with the first emit
    # matmul.
    @pl.when((ph == 0) & (k == n_k - 1))
    def _softmax():
        p_ref[...] = _softmax_rows(att_ref[...], approx).astype(p_ref.dtype)

    @pl.when(ph == 1)
    def _emit():
        if xcache_ref is not None:
            # x was cached in VMEM during phase 0 -> no second HBM read.
            off = pl.multiple_of(k * hw_tile, hw_tile)
            x = xcache_ref[:, pl.ds(off, hw_tile)]
        else:
            x = x_ref[...]
        feat = jnp.dot(p_ref[...], x.astype(mm_dtype),
                       preferred_element_type=jnp.float32)
        # Any garbage in the edge chunk only affects columns >= HW, which the
        # masked output store never writes.
        o_ref[...] = (beta_ref[0] * feat).astype(o_ref.dtype) + x


# ------------------------------- wrapper --------------------------------------

def channel_attention(x, beta, *, max_hw_tile=2048,
                      single_pass_bytes_budget=None,
                      cache_phase1_x=None,
                      matmul_dtype=None):
    """DANet channel attention forward.  x: (B, C, H, W); beta: scalar/(1,)."""
    B, C, H, W = x.shape
    HW = H * W
    dtype = x.dtype
    itemsize = jnp.dtype(dtype).itemsize
    mm_dtype = jnp.dtype(matmul_dtype) if matmul_dtype is not None else jnp.dtype(dtype)
    approx = itemsize < 4          # exact reciprocal on the f32 path

    beta_arr = jnp.asarray(beta, dtype=jnp.float32).reshape((1,))
    x_flat = x.reshape(B, C, HW)

    # --- per-chip VMEM policy -------------------------------------------------
    cap = _vmem_capacity_bytes()                   # 128 MiB v5e/v6e, 64 MiB v7x
    vmem_limit = (cap * 3) // 4                    # 96 MiB / 48 MiB scoped limit
    if single_pass_bytes_budget is None:
        single_pass_bytes_budget = cap // 2        # 64 MiB / 32 MiB

    hw128 = _round_up(HW, 128)
    c8 = _round_up(C, 8)
    ragged = (HW % 128) != 0

    # C-band split: lets v7x's two TensorCores split the work when the batch
    # axis alone cannot (B == 1).  Harmless on 1-TC chips: the x-slab block
    # index is constant along the band axis, so it is DMA'd once per batch.
    n_cbands = 2 if (B < 2 and C % 16 == 0 and C >= 16) else 1
    c_band = C // n_cbands
    cb8 = _round_up(c_band, 8)

    single_pass_bytes = (
        2 * c8 * hw128 * itemsize                  # x slab (double-buffered)
        + 2 * cb8 * hw128 * itemsize               # out band (double-buffered)
        + cb8 * hw128 * 4                          # f32 feat_e temporary
        + 3 * c8 * c8 * 4                          # att / exp / softmax tiles
        + (c8 * hw128 * itemsize if ragged else 0)  # ragged staging scratch
        + (2 << 20)                                # headroom
    )
    use_single_pass = single_pass_bytes <= min(single_pass_bytes_budget, vmem_limit)

    if use_single_pass:
        kernel = functools.partial(_single_pass_kernel, approx=approx,
                                   mm_dtype=mm_dtype)
        scratch = [pltpu.VMEM((C, hw128), dtype)] if ragged else []
        out_flat = pl.pallas_call(
            kernel,
            out_shape=jax.ShapeDtypeStruct((B, C, HW), dtype),
            grid_spec=pltpu.PrefetchScalarGridSpec(
                num_scalar_prefetch=0,
                grid=(B, n_cbands),
                in_specs=[
                    pl.BlockSpec(memory_space=pltpu.MemorySpace.SMEM),    # beta
                    pl.BlockSpec((None, C, HW), lambda b, c: (b, 0, 0)),  # x slab
                ],
                out_specs=pl.BlockSpec((None, c_band, HW),
                                       lambda b, c: (b, c, 0)),
                scratch_shapes=scratch,
            ),
            compiler_params=pltpu.CompilerParams(
                dimension_semantics=("parallel", "parallel"),
                vmem_limit_bytes=vmem_limit,
            ),
        )(beta_arr, x_flat)
        return out_flat.reshape(B, C, H, W)

    # ----------------------------- two-phase path -----------------------------
    n_k = pl.cdiv(HW, max_hw_tile)
    hw_tile = _round_up(pl.cdiv(HW, n_k), 128)
    n_k = pl.cdiv(HW, hw_tile)
    hw_cover = n_k * hw_tile                       # >= HW; edge chunk masked

    xcache_bytes = c8 * hw_cover * itemsize
    two_phase_bytes = (
        5 * c8 * hw_tile * itemsize                # x chunks (x3) + out chunks (x2)
        + c8 * hw_tile * 4                         # f32 feat temporary
        + 3 * c8 * c8 * 4
        + (2 << 20)
    )
    if cache_phase1_x is None:
        cache_phase1_x = (two_phase_bytes + xcache_bytes) <= vmem_limit - (4 << 20)

    if cache_phase1_x:
        # Pin the phase-1 x block index at the last phase-0 chunk so no DMAs
        # are issued while phase 1 reads x from the VMEM cache.
        last_k = n_k - 1
        x_map = lambda b, ph, k, lk=last_k: (b, 0, k * (1 - ph) + lk * ph)
    else:
        x_map = lambda b, ph, k: (b, 0, k)

    scratch = [pltpu.VMEM((C, C), jnp.float32),    # att accumulator
               pltpu.VMEM((C, C), mm_dtype)]       # softmax(att) in MXU dtype
    if cache_phase1_x:
        scratch.append(pltpu.VMEM((C, hw_cover), dtype))

    kernel = functools.partial(_two_phase_kernel, hw_valid=HW, approx=approx,
                               mm_dtype=mm_dtype)

    out_flat = pl.pallas_call(
        kernel,
        out_shape=jax.ShapeDtypeStruct((B, C, HW), dtype),
        grid_spec=pltpu.PrefetchScalarGridSpec(
            num_scalar_prefetch=0,
            grid=(B, 2, n_k),
            in_specs=[
                pl.BlockSpec(memory_space=pltpu.MemorySpace.SMEM),        # beta
                _block_spec((None, C, hw_tile), x_map, n_buffers=3),      # x chunks
            ],
            # Phase 0 never writes o_ref; its output block index is held at
            # (b, 0, 0) so nothing is written back until phase 1 produces the
            # block.  (Relies on Pallas only writing back when the output
            # block index changes — exercised by the B>1, n_k>1 tests below.)
            out_specs=pl.BlockSpec((None, C, hw_tile),
                                   lambda b, ph, k: (b, 0, k * ph)),
            scratch_shapes=scratch,
        ),
        compiler_params=pltpu.CompilerParams(
            dimension_semantics=("parallel", "arbitrary", "arbitrary"),
            vmem_limit_bytes=vmem_limit,
        ),
    )(beta_arr, x_flat)
    return out_flat.reshape(B, C, H, W)


# ------------------------------- reference ------------------------------------

def _reference(x, beta):
    B, C, H, W = x.shape
    a = x.reshape(B, C, H * W).astype(jnp.float32)
    att = jnp.einsum("bcn,bdn->bcd", a, a)
    att_new = jnp.max(att, axis=-1, keepdims=True) - att
    att = jax.nn.softmax(att_new, axis=-1)
    e = jnp.einsum("bcd,bdn->bcn", att, a).reshape(B, C, H, W)
    return (beta.reshape(()) * e + x.astype(jnp.float32)).astype(x.dtype)


if __name__ == "__main__":
    key = jax.random.PRNGKey(0)
    beta = jnp.asarray([0.5], dtype=jnp.float32)   # nonzero to exercise the path

    # 1) aligned f32 -> single-pass path
    x = jax.random.normal(key, (2, 4, 16, 16), dtype=jnp.float32)
    out = channel_attention(x, beta)
    jax.block_until_ready(out)
    ref = _reference(x, beta)
    assert out.shape == x.shape
    assert jnp.allclose(out, ref, atol=5e-3, rtol=5e-3), "single-pass f32 mismatch"

    # 2) bf16 inputs (MXU-native operands) -> single-pass path
    xb = x.astype(jnp.bfloat16)
    outb = channel_attention(xb, beta)
    jax.block_until_ready(outb)
    refb = _reference(xb, beta)
    assert outb.dtype == jnp.bfloat16
    assert jnp.allclose(outb.astype(jnp.float32), refb.astype(jnp.float32),
                        atol=5e-2, rtol=5e-2), "single-pass bf16 mismatch"

    # 3) ragged HW (20x20 -> 400): single-pass, no wrapper pad / output slice
    x3 = jax.random.normal(jax.random.PRNGKey(1), (2, 8, 20, 20), jnp.float32)
    out3 = channel_attention(x3, beta)
    jax.block_until_ready(out3)
    ref3 = _reference(x3, beta)
    assert jnp.allclose(out3, ref3, atol=5e-3, rtol=5e-3), "ragged single-pass mismatch"

    # 4) forced two-phase, aligned, B=2, n_k=2: exercises phase-0 accumulate,
    #    tail-of-phase-0 softmax, the x VMEM cache, and the output revisit
    #    semantics across batches.
    x4 = jax.random.normal(jax.random.PRNGKey(2), (2, 16, 16, 16), jnp.float32)
    out4 = channel_attention(x4, beta, max_hw_tile=128,
                             single_pass_bytes_budget=0)
    jax.block_until_ready(out4)
    ref4 = _reference(x4, beta)
    assert jnp.allclose(out4, ref4, atol=5e-3, rtol=5e-3), "two-phase (cached) mismatch"

    # 5) forced two-phase, ragged HW, no x-cache: exercises the edge-chunk
    #    iota masking and the re-streaming emit path.
    x5 = jax.random.normal(jax.random.PRNGKey(3), (2, 8, 20, 20), jnp.float32)
    out5 = channel_attention(x5, beta, max_hw_tile=128,
                             single_pass_bytes_budget=0, cache_phase1_x=False)
    jax.block_until_ready(out5)
    ref5 = _reference(x5, beta)
    assert jnp.allclose(out5, ref5, atol=5e-3, rtol=5e-3), "two-phase (ragged) mismatch"

    # 6) B=1, C=16 -> single-pass with the C-band split (2 bands) for 2-TC chips
    x6 = jax.random.normal(jax.random.PRNGKey(4), (1, 16, 16, 16), jnp.float32)
    out6 = channel_attention(x6, beta)
    jax.block_until_ready(out6)
    ref6 = _reference(x6, beta)
    assert jnp.allclose(out6, ref6, atol=5e-3, rtol=5e-3), "C-band single-pass mismatch"

    print("KERNEL_OK")
</pallas_src>

<mosaic_0001>
module attributes {stable_mosaic.version = 11 : i64} {
  func.func @_single_pass_kernel(%arg0: i32, %arg1: i32, %arg2: memref<1xf32, #tpu.memory_space<smem>>, %arg3: memref<1x4x256xf32, #tpu.memory_space<vmem>>, %arg4: memref<1x4x256xf32, #tpu.memory_space<vmem>>) attributes {dimension_semantics = [#tpu.dimension_semantics<parallel>, #tpu.dimension_semantics<parallel>], iteration_bounds = array<i64: 2, 1>, scalar_prefetch = 0 : i64, scratch_operands = 0 : i64, tpu.core_type = #tpu.core_type<tc>, window_params = [{transform_indices = @transform_0, window_bounds = array<i64: 1>}, {transform_indices = @transform_1, window_bounds = array<i64: 1, 4, 256>}, {transform_indices = @transform_2, window_bounds = array<i64: 1, 4, 256>}]} {
    %c0 = arith.constant 0 : index
    %c0_0 = arith.constant 0 : index
    %c0_1 = arith.constant 0 : index
    %0 = vector.load %arg3[%c0, %c0_0, %c0_1] : memref<1x4x256xf32, #tpu.memory_space<vmem>>, vector<1x4x256xf32>
    %1 = vector.shape_cast %0 : vector<1x4x256xf32> to vector<4x256xf32>
    %cst = arith.constant dense<0.000000e+00> : vector<4x4xf32>
    %2 = tpu.matmul %1, %1, %cst {dimension_numbers = #tpu.dot_dimension_numbers<[1], [1], [0], [0], [0, 0, 1, 0], [], []>} : vector<4x256xf32>, vector<4x256xf32>, vector<4x4xf32> -> vector<4x4xf32>
    %cst_2 = arith.constant dense<0x7F800000> : vector<4xf32>
    %3 = vector.multi_reduction <minimumf>, %2, %cst_2 [1] : vector<4x4xf32> to vector<4xf32>
    %4 = vector.shape_cast %3 : vector<4xf32> to vector<4x1xf32>
    %5 = vector.broadcast %4 : vector<4x1xf32> to vector<4x4xf32>
    %6 = arith.subf %5, %2 : vector<4x4xf32>
    %7 = math.exp %6 : vector<4x4xf32>
    %cst_3 = arith.constant dense<0.000000e+00> : vector<4xf32>
    %8 = vector.multi_reduction <add>, %7, %cst_3 [1] : vector<4x4xf32> to vector<4xf32>
    %9 = vector.shape_cast %8 : vector<4xf32> to vector<4x1xf32>
    %10 = tpu.reciprocal %9 : vector<4x1xf32> -> vector<4x1xf32>
    %11 = vector.broadcast %10 : vector<4x1xf32> to vector<4x4xf32>
    %12 = arith.mulf %7, %11 : vector<4x4xf32>
    %cst_4 = arith.constant dense<0.000000e+00> : vector<4x256xf32>
    %13 = tpu.matmul %12, %1, %cst_4 {dimension_numbers = #tpu.dot_dimension_numbers<[1], [0], [0], [1], [0, 0, 1, 1], [], []>} : vector<4x4xf32>, vector<4x256xf32>, vector<4x256xf32> -> vector<4x256xf32>
    %c0_5 = arith.constant 0 : index
    %14 = memref.load %arg2[%c0_5] : memref<1xf32, #tpu.memory_space<smem>>
    %15 = vector.broadcast %14 : f32 to vector<4x256xf32>
    %16 = arith.mulf %15, %13 : vector<4x256xf32>
    %17 = arith.addf %16, %1 : vector<4x256xf32>
    %c0_6 = arith.constant 0 : index
    %c0_7 = arith.constant 0 : index
    %c0_8 = arith.constant 0 : index
    %18 = vector.load %arg4[%c0_6, %c0_7, %c0_8] : memref<1x4x256xf32, #tpu.memory_space<vmem>>, vector<1x4x256xf32>
    %19 = vector.shape_cast %18 : vector<1x4x256xf32> to vector<4x256xf32>
    %20 = vector.shape_cast %17 : vector<4x256xf32> to vector<1x4x256xf32>
    tpu.vector_store %arg4[%c0_6, %c0_7, %c0_8], %20 {strides = array<i32>} : memref<1x4x256xf32, #tpu.memory_space<vmem>>, vector<1x4x256xf32>,
    return
  }
  func.func @transform_0(%arg0: i32, %arg1: i32) -> i32 {
    %c0_i32 = arith.constant 0 : i32
    %c0_i32_0 = arith.constant 0 : i32
    return %c0_i32 : i32
  }
  func.func @transform_1(%arg0: i32, %arg1: i32) -> (i32, i32, i32) {
    %c0_i32 = arith.constant 0 : i32
    %c0_i32_0 = arith.constant 0 : i32
    %c0_i32_1 = arith.constant 0 : i32
    return %arg0, %c0_i32, %c0_i32_0 : i32, i32, i32
  }
  func.func @transform_2(%arg0: i32, %arg1: i32) -> (i32, i32, i32) {
    %c0_i32 = arith.constant 0 : i32
    %c0_i32_0 = arith.constant 0 : i32
    return %arg0, %arg1, %c0_i32 : i32, i32, i32
  }
}

</mosaic_0001>

<llo_original>
// kernel: tpu_custom_call.1
$region0: #{tpu_custom_call.1}
  #allocation0 [shape = 'u32[]', space=smem, size = 0x4, offset = 0x4, fixed_abs, tag = 'smem constant byte address 0x4 - core index']
  #allocation1 [shape = 'u32[144,128]{1,0:T(1,128)}', space=vmem, size = 0x12000, scoped, tag = 'internal scratch']
  #allocation2 [shape = 'f32[1]{0:T(128)S(6)}', space=smem, size = 0x200, scoped, tag = 'scoped memory for tpu_custom_call.1']
  %s0 = inlined_call_operand.<no memory space> [shape: f32[1], index: 0, kind: input, shape index: {}]
  %s1 = inlined_call_operand.hbm [shape: f32[2,4,256], index: 1, kind: input, shape index: {}]
  %s2 = inlined_call_operand.hbm [shape: f32[2,4,256], index: 2, kind: output, shape index: {}]
  %s3 = sld [smem:[#allocation0]]
  $region45: #{tpu_custom_call.1} parent=0
    _
  %s5 = ssub.s32 1, %s3
  %s6 = scalar_select 0, %s5, %s3
  %7 = sst [smem:[#allocation2]] %s0
  $region1: #{tpu_custom_call.1} parent=0
    #allocation3 [shape = 'u8[8192]{0}', space=vmem, size = 0x2000, scoped, tag = 'input window, operand 1']
    #allocation4 [shape = 's32[2]{0}', space=sflag, size = 0x8, scoped, tag = 'scoped memory for tpu_custom_call.1']
    #allocation5 [shape = 's32[2]{0}', space=sflag, size = 0x8, scoped, tag = 'scoped memory for tpu_custom_call.1']
    #allocation6 [shape = 'u8[8192]{0}', space=vmem, size = 0x2000, scoped, tag = 'output window, operand 0']
    %8 = vsyncpa [#allocation4], 0
    %s9 = scalar_lea.sflag [#allocation4], 1
    %10 = vsyncpa %s9, 0
    %11 = vsyncpa [#allocation5], 0
    %s12 = scalar_lea.sflag [#allocation5], 1
    %13 = vsyncpa %s12, 0
    loop: start=0, step=1, limit=4
    $region2: #{tpu_custom_call.1} parent=1 // loop_pre_header
      _
    $region3: #{tpu_custom_call.1} parent=1 // loop_header
      %s15 = sphi 0, %s19
      %p16 = scmp.ge.s32.totalorder %s15, 4
      %s22 = sphi 0, %s34
      %s23 = sphi 0, %s30
      %s24 = sphi 0, %s22
      %s25 = sphi 0, %s23
      %s26 = sphi 0, %s24
      %s27 = sphi 0, %s25
      %s35 = sphi 0, %s35
      %s37 = sphi 0, %s35
      %s38 = sphi 0, %s37
      %s52 = sphi 0, %s38
      %s58 = sphi 0, %s60
      %s61 = sphi 0, %s58
      %s62 = sphi 0, %s61
      %s78 = sphi 0, %s62
      %s86 = sphi 0, %s88
      %s89 = sphi 0, %s86
      %s90 = sphi 0, %s89
      %s106 = sphi 0, %s90
    $region4: #{tpu_custom_call.1} parent=1 // loop_header_branch
      %18 = sbr.rel (%p16) target = $region8
    $region5: #{tpu_custom_call.1} parent=1 // loop_body
      %s20 = ssub.s32 %s15, 1
      %s21 = ssub.s32 %s15, 2
      %s28 = sadd.s32 1, %s23
      %p29 = scmp.ge.s32.totalorder %s28, 1
      %s30 = scalar_select %p29, 0, %s28
      %s31 = sadd.s32 1, %s22
      %s32 = scalar_select %p29, %s31, %s22
      %p33 = scmp.ge.s32.totalorder %s32, 2
      %s34 = scalar_select %p33, 0, %s32
      %s36 = sadd.s32 %s35, 1
      %p39 = scmp.eq.s32.totalorder %s15, 1
      %p40 = scmp.ne.s32.totalorder %s35, %s37
      %p41 = scmp.eq.s32.totalorder %s15, 0
      %p42 = por %p40, %p41
      %p43 = scmp.ne.s32.totalorder %s35, %s37
      %p44 = scmp.eq.s32.totalorder %s20, 1
      %p45 = por %p43, %p44
      %p46 = scmp.ne.s32.totalorder %s37, %s38
      %p47 = scmp.eq.s32.totalorder %s20, 0
      %p48 = por %p46, %p47
      %p49 = scmp.ne.s32.totalorder %s37, %s38
      %p50 = scmp.eq.s32.totalorder %s21, 1
      %p51 = por %p49, %p50
      %p53 = scmp.ne.s32.totalorder %s38, %s52
      %p54 = scmp.eq.s32.totalorder %s21, 0
      %p55 = por %p53, %p54
      %s56 = ssub.s32 %s22, %s34
      %p57 = scmp.eq.s32.totalorder %s56, 0
      %s59 = sadd.s32 %s58, 1
      %s60 = scalar_select %p57, %s58, %s59
      %p63 = pneg %p57
      %p64 = scmp.eq.s32.totalorder %s15, 1
      %p65 = por %p63, %p64
      %p66 = scmp.ne.s32.totalorder %s58, %s61
      %p67 = scmp.eq.s32.totalorder %s15, 0
      %p68 = por %p66, %p67
      %p69 = scmp.ne.s32.totalorder %s58, %s61
      %p70 = scmp.eq.s32.totalorder %s20, 1
      %p71 = por %p69, %p70
      %p72 = scmp.ne.s32.totalorder %s61, %s62
      %p73 = scmp.eq.s32.totalorder %s20, 0
      %p74 = por %p72, %p73
      %p75 = scmp.ne.s32.totalorder %s61, %s62
      %p76 = scmp.eq.s32.totalorder %s21, 1
      %p77 = por %p75, %p76
      %p79 = scmp.ne.s32.totalorder %s62, %s78
      %p80 = scmp.eq.s32.totalorder %s21, 0
      %p81 = por %p79, %p80
      %s82 = ssub.s32 %s22, %s34
      %s83 = ssub.s32 %s23, %s30
      %s84 = sor.u32 %s82, %s83
      %p85 = scmp.eq.s32.totalorder %s84, 0
      %s87 = sadd.s32 %s86, 1
      %s88 = scalar_select %p85, %s86, %s87
      %p91 = pneg %p85
      %p92 = scmp.eq.s32.totalorder %s15, 1
      %p93 = por %p91, %p92
      %p94 = scmp.ne.s32.totalorder %s86, %s89
      %p95 = scmp.eq.s32.totalorder %s15, 0
      %p96 = por %p94, %p95
      %p97 = scmp.ne.s32.totalorder %s86, %s89
      %p98 = scmp.eq.s32.totalorder %s20, 1
      %p99 = por %p97, %p98
      %p100 = scmp.ne.s32.totalorder %s89, %s90
      %p101 = scmp.eq.s32.totalorder %s20, 0
      %p102 = por %p100, %p101
      %p103 = scmp.ne.s32.totalorder %s89, %s90
      %p104 = scmp.eq.s32.totalorder %s21, 1
      %p105 = por %p103, %p104
      %p107 = scmp.ne.s32.totalorder %s90, %s106
      %p108 = scmp.eq.s32.totalorder %s21, 0
      %p109 = por %p107, %p108
      %p110 = scmp.le.s32.totalorder 1, %s15
      %p111 = scmp.lt.s32.totalorder %s15, 3
      %p112 = pnand %p110, %p111
      %p113 = pneg %p112
      // Predicated region
      $region9: #{tpu_custom_call.1} parent=5 // pred_check
        _
      $region10: #{tpu_custom_call.1} parent=5 // pred_check_branch
        %115 = sbr.rel (%p112) target = $region12
      $region11: #{tpu_custom_call.1} parent=5 // pred_region
        %s116 = ssub.s32 %s15, 1
        // Predicated region
        $region13: #{tpu_custom_call.1} parent=11 // pred_check
          %p117 = pneg %p48
        $region14: #{tpu_custom_call.1} parent=11 // pred_check_branch
          %119 = sbr.rel (%p117) target = $region16
        $region15: #{tpu_custom_call.1} parent=11 // pred_region
          _
        $region16: #{tpu_custom_call.1} parent=11 // pred_fallthru
          _
      $region12: #{tpu_custom_call.1} parent=5 // pred_fallthru
        _
      %p120 = scmp.lt.s32.totalorder %s15, 2
      // Predicated region
      $region17: #{tpu_custom_call.1} parent=5 // pred_check
        %p121 = pneg %p120
      $region18: #{tpu_custom_call.1} parent=5 // pred_check_branch
        %123 = sbr.rel (%p121) target = $region20
      $region19: #{tpu_custom_call.1} parent=5 // pred_region
        // Predicated region
        $region21: #{tpu_custom_call.1} parent=19 // pred_check
          %p124 = pneg %p68
        $region22: #{tpu_custom_call.1} parent=19 // pred_check_branch
          %126 = sbr.rel (%p124) target = $region24
        $region23: #{tpu_custom_call.1} parent=19 // pred_region
          %s127 = sand.u32 %s58, 1
          %s128 = scalar_lea.sflag [#allocation4], %s127
          %s129 = sand.u32 %s58, 1
          %s130 = smul.addr %s129, 8
          %s131 = scalar_lea.vmem [#allocation3], %s130
          %s133 = ssub.s32 128, 128
          %134 = vsyncadd %s128, %s133
          %s135 = smul.addr %s22, 2
          %s136 = smul.addr %s135, 64
          %s137 = scalar_lea.hbm %s1, %s136
          %s139 = sshll.u32 %s131, 4
          %s140 = int_to_ptr.vmem [resolvable:$true] %s139
          %142 = dma.hbm_to_vmem [thread:$0]  %s137, 128, %s140, %s128
        $region24: #{tpu_custom_call.1} parent=19 // pred_fallthru
          _
      $region20: #{tpu_custom_call.1} parent=5 // pred_fallthru
        _
      %p143 = scmp.le.s32.totalorder 1, %s15
      %p144 = scmp.lt.s32.totalorder %s15, 3
      %p145 = pnand %p143, %p144
      %p146 = pneg %p145
      // Predicated region
      $region25: #{tpu_custom_call.1} parent=5 // pred_check
        _
      $region26: #{tpu_custom_call.1} parent=5 // pred_check_branch
        %148 = sbr.rel (%p145) target = $region28
      $region27: #{tpu_custom_call.1} parent=5 // pred_region
        %s149 = ssub.s32 %s15, 1
        %s150 = sand.u32 %s61, 1
        %s151 = scalar_lea.sflag [#allocation4], %s150
        %s152 = sand.u32 %s61, 1
        %s153 = smul.addr %s152, 8
        %s154 = scalar_lea.vmem [#allocation3], %s153
        // Predicated region
        $region29: #{tpu_custom_call.1} parent=27 // pred_check
          %p155 = pneg %p74
        $region30: #{tpu_custom_call.1} parent=27 // pred_check_branch
          %157 = sbr.rel (%p155) target = $region32
        $region31: #{tpu_custom_call.1} parent=27 // pred_region
          %158 = dma.done %s151, 128
        $region32: #{tpu_custom_call.1} parent=27 // pred_fallthru
          _
        %p159 = pneg %p48
        %p160 = pneg %p45
        %s161 = sand.u32 %s61, 1
        %s162 = scalar_lea.sflag [#allocation4], %s161
        %s163 = sand.u32 %s61, 1
        %s164 = smul.addr %s163, 8
        %s165 = scalar_lea.vmem [#allocation3], %s164
        %p166 = pneg %p74
        %p167 = pneg %p71
        %p168 = pneg %p102
        %p169 = pneg %p99
        %s170 = sand.u32 %s89, 1
        %s171 = scalar_lea.sflag [#allocation5], %s170
        %s172 = sand.u32 %s89, 1
        %s173 = smul.addr %s172, 8
        %s174 = scalar_lea.vmem [#allocation6], %s173
        %v175 = vld [vmem:[%s154] sm:$0xff]
        %v177 = vcombine.high %v175, %v175
        %179 = vmatprep.subr.mxu0 %v177
        %180 = vmatpush1.xpose.msra.mxu0 %v175
        %181 = vmatprep.subr.mxu0 0.0
        %182 = vmatpush1.xpose.msra.mxu0 0.0
        %183 = vmatprep.subr.mxu0 0.0
        %184 = vmatpush1.xpose.msra.mxu0 0.0
        %185 = vmatprep.subr.mxu0 0.0
        %186 = vmatpush1.xpose.msra.mxu0 0.0
        %187 = vmatprep.subr.mxu0 0.0
        %188 = vmatpush1.xpose.msra.mxu0 0.0
        %189 = vmatprep.subr.mxu0 0.0
        %190 = vmatpush1.xpose.msra.mxu0 0.0
        %191 = vmatprep.subr.mxu0 0.0
        %192 = vmatpush1.xpose.msra.mxu0 0.0
        %193 = vmatprep.subr.mxu0 0.0
        %194 = vmatpush1.xpose.msra.mxu0 0.0
        %195 = vmatprep.subr.mxu0 0.0
        %196 = vmatpush1.xpose.msra.mxu0 0.0
        %197 = vmatprep.subr.mxu0 0.0
        %198 = vmatpush1.xpose.msra.mxu0 0.0
        %199 = vmatprep.subr.mxu0 0.0
        %200 = vmatpush1.xpose.msra.mxu0 0.0
        %201 = vmatprep.subr.mxu0 0.0
        %202 = vmatpush1.xpose.msra.mxu0 0.0
        %203 = vmatprep.subr.mxu0 0.0
        %204 = vmatpush1.xpose.msra.mxu0 0.0
        %205 = vmatprep.subr.mxu0 0.0
        %206 = vmatpush1.xpose.msra.mxu0 0.0
        %207 = vmatprep.subr.mxu0 0.0
        %208 = vmatpush1.xpose.msra.mxu0 0.0
        %209 = vmatprep.subr.mxu0 0.0
        %210 = vmatpush1.xpose.msra.mxu0 0.0
        %211 = vmatprep.subr.mxu0 0.0
        %212 = vmatpush1.xpose.msra.mxu0 0.0
        %213 = vmatprep.subr.mxu0 0.0
        %214 = vmatpush1.xpose.msra.mxu0 0.0
        %215 = vmatprep.subr.mxu0 0.0
        %216 = vmatpush1.xpose.msra.mxu0 0.0
        %217 = vmatprep.subr.mxu0 0.0
        %218 = vmatpush1.xpose.msra.mxu0 0.0
        %219 = vmatprep.subr.mxu0 0.0
        %220 = vmatpush1.xpose.msra.mxu0 0.0
        %221 = vmatprep.subr.mxu0 0.0
        %222 = vmatpush1.xpose.msra.mxu0 0.0
        %223 = vmatprep.subr.mxu0 0.0
        %224 = vmatpush1.xpose.msra.mxu0 0.0
        %225 = vmatprep.subr.mxu0 0.0
        %226 = vmatpush1.xpose.msra.mxu0 0.0
        %227 = vmatprep.subr.mxu0 0.0
        %228 = vmatpush1.xpose.msra.mxu0 0.0
        %229 = vmatprep.subr.mxu0 0.0
        %230 = vmatpush1.xpose.msra.mxu0 0.0
        %231 = vmatprep.subr.mxu0 0.0
        %232 = vmatpush1.xpose.msra.mxu0 0.0
        %233 = vmatprep.subr.mxu0 0.0
        %234 = vmatpush1.xpose.msra.mxu0 0.0
        %235 = vmatprep.subr.mxu0 0.0
        %236 = vmatpush1.xpose.msra.mxu0 0.0
        %237 = vmatprep.subr.mxu0 0.0
        %238 = vmatpush1.xpose.msra.mxu0 0.0
        %239 = vmatprep.subr.mxu0 0.0
        %240 = vmatpush1.xpose.msra.mxu0 0.0
        %241 = vmatprep.subr.mxu0 0.0
        %242 = vmatpush1.xpose.msra.mxu0 0.0
        %243 = vmatprep.mubr.f32.mxu0 %v177
        %244 = vmatmul.mubr.f32.gmra.mrb[0].mxu0 %v175
        %v245 = vpop.f32.mrb[0].mxu0
        %v246 = vadd.f32 0.0, %v245
        %v247 = vpop.f32.mrb[0].mxu0
        %248 = vdwg.mxu0
        %vm249 = vcmask 27648
        %v250 = vsel %vm249, %v246, inf
        %251 = vmin.xlane.f32.xlu0 %v250
        %v252 = vpop.xlane.xlu0 %251
        %v253 = vsub.f32 %v252, %v246
        %v254 = vmul.f32 %v253, 1.442695
        %v255 = vpow.pop %v254
        %v256 = vsel %vm249, %v255, 0.0
        %257 = vadd.xlane.f32.xlu0 %v256
        %v258 = vpop.xlane.xlu0 %257
        %v259 = vrcp.pop %v258
        %v260 = vmul.f32 %v255, %v259
        %vm261 = vcmask 31744
        %v263 = vsel %vm261, %v260, 0
        %vm265 = vcmask 1043456
        %v266 = vsel %vm265, %v175, 0
        %v268 = vsel %vm265, %v177, 0
        %270 = vmatprep.subr.mxu0 %v268
        %271 = vmatpush1.msra.mxu0 %v266
        %272 = vmatprep.subr.mxu0 0.0
        %273 = vmatpush1.msra.mxu0 0.0
        %274 = vmatprep.subr.mxu0 0.0
        %275 = vmatpush1.msra.mxu0 0.0
        %276 = vmatprep.subr.mxu0 0.0
        %277 = vmatpush1.msra.mxu0 0.0
        %278 = vmatprep.subr.mxu0 0.0
        %279 = vmatpush1.msra.mxu0 0.0
        %280 = vmatprep.subr.mxu0 0.0
        %281 = vmatpush1.msra.mxu0 0.0
        %282 = vmatprep.subr.mxu0 0.0
        %283 = vmatpush1.msra.mxu0 0.0
        %284 = vmatprep.subr.mxu0 0.0
        %285 = vmatpush1.msra.mxu0 0.0
        %286 = vmatprep.subr.mxu0 0.0
        %287 = vmatpush1.msra.mxu0 0.0
        %288 = vmatprep.subr.mxu0 0.0
        %289 = vmatpush1.msra.mxu0 0.0
        %290 = vmatprep.subr.mxu0 0.0
        %291 = vmatpush1.msra.mxu0 0.0
        %292 = vmatprep.subr.mxu0 0.0
        %293 = vmatpush1.msra.mxu0 0.0
        %294 = vmatprep.subr.mxu0 0.0
        %295 = vmatpush1.msra.mxu0 0.0
        %296 = vmatprep.subr.mxu0 0.0
        %297 = vmatpush1.msra.mxu0 0.0
        %298 = vmatprep.subr.mxu0 0.0
        %299 = vmatpush1.msra.mxu0 0.0
        %300 = vmatprep.subr.mxu0 0.0
        %301 = vmatpush1.msra.mxu0 0.0
        %302 = vmatprep.subr.mxu0 0.0
        %303 = vmatpush1.msra.mxu0 0.0
        %304 = vmatprep.subr.mxu0 0.0
        %305 = vmatpush1.msra.mxu0 0.0
        %306 = vmatprep.subr.mxu0 0.0
        %307 = vmatpush1.msra.mxu0 0.0
        %308 = vmatprep.subr.mxu0 0.0
        %309 = vmatpush1.msra.mxu0 0.0
        %310 = vmatprep.subr.mxu0 0.0
        %311 = vmatpush1.msra.mxu0 0.0
        %312 = vmatprep.subr.mxu0 0.0
        %313 = vmatpush1.msra.mxu0 0.0
        %314 = vmatprep.subr.mxu0 0.0
        %315 = vmatpush1.msra.mxu0 0.0
        %316 = vmatprep.subr.mxu0 0.0
        %317 = vmatpush1.msra.mxu0 0.0
        %318 = vmatprep.subr.mxu0 0.0
        %319 = vmatpush1.msra.mxu0 0.0
        %320 = vmatprep.subr.mxu0 0.0
        %321 = vmatpush1.msra.mxu0 0.0
        %322 = vmatprep.subr.mxu0 0.0
        %323 = vmatpush1.msra.mxu0 0.0
        %324 = vmatprep.subr.mxu0 0.0
        %325 = vmatpush1.msra.mxu0 0.0
        %326 = vmatprep.subr.mxu0 0.0
        %327 = vmatpush1.msra.mxu0 0.0
        %328 = vmatprep.subr.mxu0 0.0
        %329 = vmatpush1.msra.mxu0 0.0
        %330 = vmatprep.subr.mxu0 0.0
        %331 = vmatpush1.msra.mxu0 0.0
        %332 = vmatprep.subr.mxu0 0.0
        %333 = vmatpush1.msra.mxu0 0.0
        %334 = vmatprep.mubr.f32.mxu0 0.0
        %335 = vmatmul.mubr.f32.gmra.mrb[0].mxu0 %v263
        %v336 = vpop.f32.mrb[0].mxu0
        %v337 = vadd.f32 0.0, %v336
        %v338 = vpop.f32.mrb[0].mxu0
        %v339 = vadd.f32 0.0, %v338
        %340 = vdwg.mxu0
        %s341 = sld [smem:[#allocation2]]
        %v342 = vstv %s341
        %v343 = vmul.f32 %v342, %v337
        %v344 = vmul.f32 %v342, %v339
        %v345 = vadd.f32 %v343, %v175
        %v346 = vadd.f32 %v344, %v177
        %v349 = vcombine.low %v345, %v346
        %351 = vst [vmem:[%s174] sm:$0xff] %v349
        %s352 = sand.u32 %s89, 1
        %s353 = scalar_lea.sflag [#allocation5], %s352
        %s354 = sand.u32 %s89, 1
        %s355 = smul.addr %s354, 8
        %s356 = scalar_lea.vmem [#allocation6], %s355
        // Predicated region
        $region33: #{tpu_custom_call.1} parent=27 // pred_check
          %p357 = pneg %p99
        $region34: #{tpu_custom_call.1} parent=27 // pred_check_branch
          %359 = sbr.rel (%p357) target = $region36
        $region35: #{tpu_custom_call.1} parent=27 // pred_region
          %s361 = ssub.s32 128, 128
          %362 = vsyncadd %s353, %s361
          %s363 = smul.addr %s25, 2
          %s364 = smul.addr %s24, 2
          %s365 = sadd.s32 %s363, %s364
          %s366 = smul.addr %s365, 64
          %s367 = scalar_lea.hbm %s2, %s366
          %s369 = sshll.u32 %s356, 4
          %s370 = int_to_ptr.vmem [resolvable:$true] %s369
          %372 = dma.vmem_to_hbm [thread:$0]  %s370, 128, %s367, %s353
        $region36: #{tpu_custom_call.1} parent=27 // pred_fallthru
          _
      $region28: #{tpu_custom_call.1} parent=5 // pred_fallthru
        _
      %p373 = scmp.le.s32.totalorder 2, %s15
      // Predicated region
      $region37: #{tpu_custom_call.1} parent=5 // pred_check
        %p374 = pneg %p373
      $region38: #{tpu_custom_call.1} parent=5 // pred_check_branch
        %376 = sbr.rel (%p374) target = $region40
      $region39: #{tpu_custom_call.1} parent=5 // pred_region
        %s377 = ssub.s32 %s15, 2
        // Predicated region
        $region41: #{tpu_custom_call.1} parent=39 // pred_check
          %p378 = pneg %p105
        $region42: #{tpu_custom_call.1} parent=39 // pred_check_branch
          %380 = sbr.rel (%p378) target = $region44
        $region43: #{tpu_custom_call.1} parent=39 // pred_region
          %s381 = sand.u32 %s90, 1
          %s382 = scalar_lea.sflag [#allocation5], %s381
          %s383 = sand.u32 %s90, 1
          %s384 = smul.addr %s383, 8
          %s385 = scalar_lea.vmem [#allocation6], %s384
          %386 = dma.done %s382, 128
        $region44: #{tpu_custom_call.1} parent=39 // pred_fallthru
          _
      $region40: #{tpu_custom_call.1} parent=5 // pred_fallthru
        _
    $region6: #{tpu_custom_call.1} parent=1 // loop_footer
      %s19 = sadd.s32 1, %s15
    $region7: #{tpu_custom_call.1} parent=1 // loop_footer_branch
      %14 = sbr.rel target = $region3
    $region8: #{tpu_custom_call.1} parent=1 // loop_exit
      _
    %387 = vsyncpa [#allocation4], 1
    %s388 = scalar_lea.sflag [#allocation4], 1
    %389 = vsyncpa %s388, 1
    %390 = vsyncpa [#allocation5], 1
    %s391 = scalar_lea.sflag [#allocation5], 1
    %392 = vsyncpa %s391, 1

</llo_original>
